<compile_context>
chip_gen: v7x
topology: tpu7x:2x2x1
jax: 0.10.0
libtpu: 0.0.40
codegen_flags: <defaults>
</compile_context>

<pallas_src>
import math

import jax
import jax.numpy as jnp
from jax.experimental import pallas as pl
from jax.experimental.pallas import tpu as pltpu

LANE = 128
NEG_BIG = -1e9  # finite "minus infinity" for padded bins (exp -> 0, not NaN)


# ----------------------------- parameter construction ---------------------- #
def sym_exp(x):
    # inverse of symlog: sign(x) * (exp(|x|) - 1)
    return jnp.sign(x) * (jnp.exp(jnp.abs(x)) - 1.0)


def make_params(in_features, out_features, key):
    """Deterministic parameters mirroring the PyTorch __init__
    (sym_log_normalize=False, support=None)."""
    bound = 1.0 / jnp.sqrt(jnp.float32(in_features))
    # nn.Linear weight is (out, in); keep it transposed as (in, out) for x @ W.
    W = jax.random.uniform(key, (in_features, out_features), jnp.float32, -bound, bound)

    # default support = sym_exp(linspace(-15, 15, out_features))
    support = sym_exp(jnp.linspace(-15.0, 15.0, out_features, dtype=jnp.float32))

    # bias = -|support| / (support.max() / log(|support|.max()))
    bias = -jnp.abs(support) / (jnp.max(support) / jnp.log(jnp.max(jnp.abs(support))))

    # HLGaussLoss support: linspace(support[0], support[-1], num_bins + 1)
    hl_support = jnp.linspace(support[0], support[-1], out_features + 1, dtype=jnp.float32)
    centers = 0.5 * (hl_support[:-1] + hl_support[1:])  # (out_features,)
    return W, bias, centers


def prepare_padded_params(W, bias, centers):
    """One-time padding of the bins axis K to a lane multiple (128) and packing
    of centers/ones into the PRE-TRANSPOSED (Kp, 128) MXU reduction matrix so
    the in-kernel reduction is e @ CW_T (no transpose of the exp tile)."""
    D, K = W.shape
    Kp = pl.cdiv(K, LANE) * LANE
    Wp = jnp.zeros((D, Kp), jnp.float32).at[:, :K].set(W.astype(jnp.float32))
    # Padded logit columns get a large negative finite bias: exp underflows to 0.
    bp = jnp.full((1, Kp), NEG_BIG, jnp.float32).at[0, :K].set(bias.astype(jnp.float32))
    cwt = jnp.zeros((Kp, LANE), jnp.float32)
    cwt = cwt.at[:K, 0].set(centers.astype(jnp.float32))  # col 0: bin centers
    cwt = cwt.at[:K, 1].set(1.0)                           # col 1: ones (softmax denom)
    return Wp, bp, cwt


# ----------------------------- Pallas kernel ------------------------------- #
def _head_kernel(x_ref, w_ref, b_ref, cwt_ref, o_ref):
    # x: (TM, D); w: (D, Kp); b: (1, Kp); cwt: (Kp, 128); o: (TM, 1)
    logits = (
        jnp.dot(x_ref[...], w_ref[...], preferred_element_type=jnp.float32)
        + b_ref[...]
    )                                                      # (TM, Kp)  MXU + VPU
    m = jnp.max(logits, axis=-1, keepdims=True)            # (TM, 1)   XLU lane reduce
    e = jnp.exp(logits - m)                                # (TM, Kp)  EUP
    # Fused softmax reductions on the MXU, standard orientation (no e.T):
    #   col 0 -> sum_k e_k * c_k,  col 1 -> sum_k e_k.
    red = jnp.dot(e, cwt_ref[...], preferred_element_type=jnp.float32)  # (TM, 128)
    num = red[:, 0:1]                                      # (TM, 1)
    den = red[:, 1:2]                                      # (TM, 1)
    o_ref[...] = num / den                                 # exact divide (tiny slab)


def _choose_tm(M, tm_max):
    """Row tile: multiple of 128; big enough to amortize the ~0.35 us per-step
    overhead, but (when possible) >= 2 tiles so v7x can shard M across TCs."""
    tm_max = max(LANE, (tm_max // LANE) * LANE)
    m128 = pl.cdiv(M, LANE) * LANE
    if m128 <= LANE:
        return LANE
    if m128 <= tm_max:
        return pl.cdiv(m128 // LANE, 2) * LANE   # split into ~2 tiles
    return tm_max


def hl_gauss_head_forward(x, Wp, bias_p, cwt, *, tm_max=2048):
    """x: (..., in_features) float32 -> (...,) float32.
    Wp / bias_p / cwt come from prepare_padded_params (K padded to lane mult)."""
    D, Kp = Wp.shape
    assert x.shape[-1] == D
    batch_shape = x.shape[:-1]
    M = math.prod(batch_shape) if batch_shape else 1
    x2 = x.reshape(M, D).astype(jnp.float32)

    tm = _choose_tm(M, tm_max)
    num_tiles = pl.cdiv(M, tm)
    m_pad = num_tiles * tm
    if m_pad != M:
        # Zero rows are harmless: logits = bias -> finite softmax; sliced off below.
        x2 = jnp.zeros((m_pad, D), jnp.float32).at[:M].set(x2)

    cost = pl.CostEstimate(
        flops=2 * m_pad * D * Kp + 2 * m_pad * Kp * LANE + m_pad,
        transcendentals=m_pad * Kp + m_pad,
        bytes_accessed=m_pad * D * 4 + D * Kp * 4 + Kp * 4 + Kp * LANE * 4 + m_pad * 4,
    )

    out = pl.pallas_call(
        _head_kernel,
        out_shape=jax.ShapeDtypeStruct((m_pad, 1), jnp.float32),
        grid_spec=pltpu.PrefetchScalarGridSpec(
            num_scalar_prefetch=0,
            grid=(num_tiles,),
            in_specs=[
                pl.BlockSpec((tm, D), lambda i: (i, 0)),      # streamed x tiles
                pl.BlockSpec((D, Kp), lambda i: (0, 0)),      # resident weights
                pl.BlockSpec((1, Kp), lambda i: (0, 0)),      # resident bias
                pl.BlockSpec((Kp, LANE), lambda i: (0, 0)),   # resident centers/ones^T
            ],
            out_specs=pl.BlockSpec((tm, 1), lambda i: (i, 0)),
        ),
        compiler_params=pltpu.CompilerParams(
            dimension_semantics=("parallel",),   # shard M across TCs on v7x
            vmem_limit_bytes=32 * 1024 * 1024,   # explicit; actual footprint ~4 MiB
        ),
        cost_estimate=cost,
    )(x2, Wp, bias_p, cwt)

    return out.reshape(m_pad)[:M].reshape(batch_shape)


# ----------------------------- reference (plain JAX) ----------------------- #
def reference_forward(x, W, bias, centers):
    logits = jnp.dot(x, W, precision=jax.lax.Precision.HIGHEST) + bias
    probs = jax.nn.softmax(logits, axis=-1)
    return jnp.einsum(
        "...k,k->...", probs, centers, precision=jax.lax.Precision.HIGHEST
    )


# --------------------------------- main ------------------------------------ #
if __name__ == "__main__":
    in_features, out_features = 32, 64

    key = jax.random.PRNGKey(0)
    kx1, kx2, kp = jax.random.split(key, 3)

    W, bias, centers = make_params(in_features, out_features, kp)
    Wp, bias_p, cwt = prepare_padded_params(W, bias, centers)  # one-time padding

    # Tolerances: exact divide removes the approx-recip error; remaining diffs
    # are f32 summation-order / exp-ULP noise.  Outputs reach ~3.3e6 and can
    # cancel toward 0, so keep a small absolute floor for +/-center cancellation.
    rtol, atol = 2e-3, 2.0

    # Case 1: small batch (single grid step with row padding) — spec-sized input.
    x1 = jax.random.normal(kx1, (2, 8, in_features), dtype=jnp.float32)
    out1 = jax.block_until_ready(hl_gauss_head_forward(x1, Wp, bias_p, cwt))
    ref1 = reference_forward(x1, W, bias, centers)
    assert out1.shape == (2, 8)
    assert jnp.allclose(out1, ref1, rtol=rtol, atol=atol), (out1, ref1)

    # Case 2: multi-tile + m_pad > M slicing path (M = 291 -> tm = 256, 2 tiles).
    x2 = jax.random.normal(kx2, (3, 97, in_features), dtype=jnp.float32)
    out2 = jax.block_until_ready(hl_gauss_head_forward(x2, Wp, bias_p, cwt))
    ref2 = reference_forward(x2, W, bias, centers)
    assert out2.shape == (3, 97)
    assert jnp.allclose(out2, ref2, rtol=rtol, atol=atol), (out2, ref2)

    print("KERNEL_OK")
</pallas_src>

<mosaic_0001>
module attributes {stable_mosaic.version = 11 : i64} {
  func.func @_head_kernel(%arg0: i32, %arg1: memref<128x32xf32, #tpu.memory_space<vmem>>, %arg2: memref<32x128xf32, #tpu.memory_space<vmem>>, %arg3: memref<1x128xf32, #tpu.memory_space<vmem>>, %arg4: memref<128x128xf32, #tpu.memory_space<vmem>>, %arg5: memref<128x1xf32, #tpu.memory_space<vmem>>) attributes {dimension_semantics = [#tpu.dimension_semantics<parallel>], iteration_bounds = array<i64: 1>, scalar_prefetch = 0 : i64, scratch_operands = 0 : i64, tpu.core_type = #tpu.core_type<tc>, window_params = [{transform_indices = @transform_0, window_bounds = array<i64: 128, 32>}, {pipeline_mode = #tpu.pipeline_mode<synchronous>, transform_indices = @transform_1, window_bounds = array<i64: 32, 128>}, {pipeline_mode = #tpu.pipeline_mode<synchronous>, transform_indices = @transform_2, window_bounds = array<i64: 1, 128>}, {pipeline_mode = #tpu.pipeline_mode<synchronous>, transform_indices = @transform_3, window_bounds = array<i64: 128, 128>}, {transform_indices = @transform_4, window_bounds = array<i64: 128, 1>}]} {
    %c0 = arith.constant 0 : index
    %c0_0 = arith.constant 0 : index
    %0 = vector.load %arg1[%c0, %c0_0] : memref<128x32xf32, #tpu.memory_space<vmem>>, vector<128x32xf32>
    %c0_1 = arith.constant 0 : index
    %c0_2 = arith.constant 0 : index
    %1 = vector.load %arg2[%c0_1, %c0_2] : memref<32x128xf32, #tpu.memory_space<vmem>>, vector<32x128xf32>
    %cst = arith.constant dense<0.000000e+00> : vector<128x128xf32>
    %2 = tpu.matmul %0, %1, %cst {dimension_numbers = #tpu.dot_dimension_numbers<[1], [0], [0], [1], [0, 0, 1, 1], [], []>} : vector<128x32xf32>, vector<32x128xf32>, vector<128x128xf32> -> vector<128x128xf32>
    %c0_3 = arith.constant 0 : index
    %c0_4 = arith.constant 0 : index
    %3 = vector.load %arg3[%c0_3, %c0_4] : memref<1x128xf32, #tpu.memory_space<vmem>>, vector<1x128xf32>
    %4 = vector.broadcast %3 : vector<1x128xf32> to vector<128x128xf32>
    %5 = arith.addf %2, %4 : vector<128x128xf32>
    %cst_5 = arith.constant dense<0xFF800000> : vector<128xf32>
    %6 = vector.multi_reduction <maximumf>, %5, %cst_5 [1] : vector<128x128xf32> to vector<128xf32>
    %7 = vector.shape_cast %6 : vector<128xf32> to vector<128x1xf32>
    %8 = vector.broadcast %7 : vector<128x1xf32> to vector<128x128xf32>
    %9 = arith.subf %5, %8 : vector<128x128xf32>
    %10 = math.exp %9 : vector<128x128xf32>
    %c0_6 = arith.constant 0 : index
    %c0_7 = arith.constant 0 : index
    %11 = vector.load %arg4[%c0_6, %c0_7] : memref<128x128xf32, #tpu.memory_space<vmem>>, vector<128x128xf32>
    %cst_8 = arith.constant dense<0.000000e+00> : vector<128x128xf32>
    %12 = tpu.matmul %10, %11, %cst_8 {dimension_numbers = #tpu.dot_dimension_numbers<[1], [0], [0], [1], [0, 0, 1, 1], [], []>} : vector<128x128xf32>, vector<128x128xf32>, vector<128x128xf32> -> vector<128x128xf32>
    %13 = vector.extract_strided_slice %12 {offsets = [0, 0], sizes = [128, 1], strides = [1, 1]} : vector<128x128xf32> to vector<128x1xf32>
    %14 = vector.extract_strided_slice %12 {offsets = [0, 1], sizes = [128, 1], strides = [1, 1]} : vector<128x128xf32> to vector<128x1xf32>
    %15 = arith.divf %13, %14 : vector<128x1xf32>
    %c0_9 = arith.constant 0 : index
    %c0_10 = arith.constant 0 : index
    %16 = vector.load %arg5[%c0_9, %c0_10] : memref<128x1xf32, #tpu.memory_space<vmem>>, vector<128x1xf32>
    tpu.vector_store %arg5[%c0_9, %c0_10], %15 {strides = array<i32>} : memref<128x1xf32, #tpu.memory_space<vmem>>, vector<128x1xf32>,
    return
  }
  func.func @transform_0(%arg0: i32) -> (i32, i32) {
    %c0_i32 = arith.constant 0 : i32
    %c0_i32_0 = arith.constant 0 : i32
    return %arg0, %c0_i32 : i32, i32
  }
  func.func @transform_1(%arg0: i32) -> (i32, i32) {
    %c0_i32 = arith.constant 0 : i32
    %c0_i32_0 = arith.constant 0 : i32
    %c0_i32_1 = arith.constant 0 : i32
    return %c0_i32, %c0_i32_0 : i32, i32
  }
  func.func @transform_2(%arg0: i32) -> (i32, i32) {
    %c0_i32 = arith.constant 0 : i32
    %c0_i32_0 = arith.constant 0 : i32
    %c0_i32_1 = arith.constant 0 : i32
    return %c0_i32, %c0_i32_0 : i32, i32
  }
  func.func @transform_3(%arg0: i32) -> (i32, i32) {
    %c0_i32 = arith.constant 0 : i32
    %c0_i32_0 = arith.constant 0 : i32
    %c0_i32_1 = arith.constant 0 : i32
    return %c0_i32, %c0_i32_0 : i32, i32
  }
  func.func @transform_4(%arg0: i32) -> (i32, i32) {
    %c0_i32 = arith.constant 0 : i32
    %c0_i32_0 = arith.constant 0 : i32
    return %arg0, %c0_i32 : i32, i32
  }
}

</mosaic_0001>

<llo_original>
// kernel: tpu_custom_call.1
$region0: #{tpu_custom_call.1}
  #allocation0 [shape = 'u32[]', space=smem, size = 0x4, offset = 0x4, fixed_abs, tag = 'smem constant byte address 0x4 - core index']
  #allocation1 [shape = 'u32[144,128]{1,0:T(1,128)}', space=vmem, size = 0x12000, scoped, tag = 'internal scratch']
  %s0 = inlined_call_operand.vmem [shape: f32[128,32], index: 0, kind: input, shape index: {}]
  %s1 = inlined_call_operand.vmem [shape: f32[32,128], index: 1, kind: input, shape index: {}]
  %s2 = inlined_call_operand.vmem [shape: f32[1,128], index: 2, kind: input, shape index: {}]
  %s3 = inlined_call_operand.vmem [shape: f32[128,128], index: 3, kind: input, shape index: {}]
  %s4 = inlined_call_operand.vmem [shape: f32[128,1], index: 4, kind: output, shape index: {}]
  %s5 = sld [smem:[#allocation0]]
  $region26: #{tpu_custom_call.1} parent=0
    _
  %s7 = ssub.s32 1, %s5
  %s8 = scalar_select 0, %s7, %s5
  // Predicated region
  $region2: #{tpu_custom_call.1} parent=0 // pred_check
    _
  $region3: #{tpu_custom_call.1} parent=0 // pred_check_branch
    %10 = sbr.rel (0) target = $region5
  $region4: #{tpu_custom_call.1} parent=0 // pred_region
    _
  $region5: #{tpu_custom_call.1} parent=0 // pred_fallthru
    _
  // Predicated region
  $region6: #{tpu_custom_call.1} parent=0 // pred_check
    _
  $region7: #{tpu_custom_call.1} parent=0 // pred_check_branch
    %12 = sbr.rel (0) target = $region9
  $region8: #{tpu_custom_call.1} parent=0 // pred_region
    _
  $region9: #{tpu_custom_call.1} parent=0 // pred_fallthru
    _
  // Predicated region
  $region10: #{tpu_custom_call.1} parent=0 // pred_check
    _
  $region11: #{tpu_custom_call.1} parent=0 // pred_check_branch
    %14 = sbr.rel (0) target = $region13
  $region12: #{tpu_custom_call.1} parent=0 // pred_region
    _
  $region13: #{tpu_custom_call.1} parent=0 // pred_fallthru
    _
  // Predicated region
  $region14: #{tpu_custom_call.1} parent=0 // pred_check
    _
  $region15: #{tpu_custom_call.1} parent=0 // pred_check_branch
    %16 = sbr.rel (0) target = $region17
  $region16: #{tpu_custom_call.1} parent=0 // pred_region
    _
  $region17: #{tpu_custom_call.1} parent=0 // pred_fallthru
    _
  %v17 = vld [vmem:[%s0] sm:$0xff]
  %v18 = vld [vmem:[%s0 + $0x8] sm:$0xff]
  %v19 = vld [vmem:[%s0 + $0x10] sm:$0xff]
  %v20 = vld [vmem:[%s0 + $0x18] sm:$0xff]
  %v21 = vld [vmem:[%s0 + $0x20] sm:$0xff]
  %v22 = vld [vmem:[%s0 + $0x28] sm:$0xff]
  %v23 = vld [vmem:[%s0 + $0x30] sm:$0xff]
  %v24 = vld [vmem:[%s0 + $0x38] sm:$0xff]
  %v25 = vld [vmem:[%s0 + $0x40] sm:$0xff]
  %v26 = vld [vmem:[%s0 + $0x48] sm:$0xff]
  %v27 = vld [vmem:[%s0 + $0x50] sm:$0xff]
  %v28 = vld [vmem:[%s0 + $0x58] sm:$0xff]
  %v29 = vld [vmem:[%s0 + $0x60] sm:$0xff]
  %v30 = vld [vmem:[%s0 + $0x68] sm:$0xff]
  %v31 = vld [vmem:[%s0 + $0x70] sm:$0xff]
  %v32 = vld [vmem:[%s0 + $0x78] sm:$0xff]
  %v33 = vld [vmem:[%s1] sm:$0xff]
  %v34 = vld [vmem:[%s1 + $0x8] sm:$0xff]
  %v35 = vld [vmem:[%s1 + $0x10] sm:$0xff]
  %v36 = vld [vmem:[%s1 + $0x18] sm:$0xff]
  %v37 = vld [vmem:[%s2] sm:$0x1]
  %v39 = vlaneseq
  %v40 = vshrl.u32 %v39, 7
  %v41 = vsub.s32 0, %v40
  %v42 = vrot.slane %v37, %v41
  %vm44 = vcmask 261120
  %v46 = vsel %vm44, %v17, 0
  %v49 = vsel %vm44, %v18, 0
  %v52 = vsel %vm44, %v19, 0
  %v55 = vsel %vm44, %v20, 0
  %v58 = vsel %vm44, %v21, 0
  %v61 = vsel %vm44, %v22, 0
  %v64 = vsel %vm44, %v23, 0
  %v67 = vsel %vm44, %v24, 0
  %v70 = vsel %vm44, %v25, 0
  %v73 = vsel %vm44, %v26, 0
  %v76 = vsel %vm44, %v27, 0
  %v79 = vsel %vm44, %v28, 0
  %v82 = vsel %vm44, %v29, 0
  %v85 = vsel %vm44, %v30, 0
  %v88 = vsel %vm44, %v31, 0
  %v91 = vsel %vm44, %v32, 0
  %93 = vmatprep.subr.mxu0 0.0
  %94 = vmatpush1.msra.mxu0 %v33
  %95 = vmatprep.subr.mxu0 0.0
  %96 = vmatpush1.msra.mxu0 %v34
  %97 = vmatprep.subr.mxu0 0.0
  %98 = vmatpush1.msra.mxu0 %v35
  %99 = vmatprep.subr.mxu0 0.0
  %100 = vmatpush1.msra.mxu0 %v36
  %101 = vmatprep.subr.mxu0 0.0
  %102 = vmatpush1.msra.mxu0 0.0
  %103 = vmatprep.subr.mxu0 0.0
  %104 = vmatpush1.msra.mxu0 0.0
  %105 = vmatprep.subr.mxu0 0.0
  %106 = vmatpush1.msra.mxu0 0.0
  %107 = vmatprep.subr.mxu0 0.0
  %108 = vmatpush1.msra.mxu0 0.0
  %109 = vmatprep.subr.mxu0 0.0
  %110 = vmatpush1.msra.mxu0 0.0
  %111 = vmatprep.subr.mxu0 0.0
  %112 = vmatpush1.msra.mxu0 0.0
  %113 = vmatprep.subr.mxu0 0.0
  %114 = vmatpush1.msra.mxu0 0.0
  %115 = vmatprep.subr.mxu0 0.0
  %116 = vmatpush1.msra.mxu0 0.0
  %117 = vmatprep.subr.mxu0 0.0
  %118 = vmatpush1.msra.mxu0 0.0
  %119 = vmatprep.subr.mxu0 0.0
  %120 = vmatpush1.msra.mxu0 0.0
  %121 = vmatprep.subr.mxu0 0.0
  %122 = vmatpush1.msra.mxu0 0.0
  %123 = vmatprep.subr.mxu0 0.0
  %124 = vmatpush1.msra.mxu0 0.0
  %125 = vmatprep.subr.mxu0 0.0
  %126 = vmatpush1.msra.mxu0 0.0
  %127 = vmatprep.subr.mxu0 0.0
  %128 = vmatpush1.msra.mxu0 0.0
  %129 = vmatprep.subr.mxu0 0.0
  %130 = vmatpush1.msra.mxu0 0.0
  %131 = vmatprep.subr.mxu0 0.0
  %132 = vmatpush1.msra.mxu0 0.0
  %133 = vmatprep.subr.mxu0 0.0
  %134 = vmatpush1.msra.mxu0 0.0
  %135 = vmatprep.subr.mxu0 0.0
  %136 = vmatpush1.msra.mxu0 0.0
  %137 = vmatprep.subr.mxu0 0.0
  %138 = vmatpush1.msra.mxu0 0.0
  %139 = vmatprep.subr.mxu0 0.0
  %140 = vmatpush1.msra.mxu0 0.0
  %141 = vmatprep.subr.mxu0 0.0
  %142 = vmatpush1.msra.mxu0 0.0
  %143 = vmatprep.subr.mxu0 0.0
  %144 = vmatpush1.msra.mxu0 0.0
  %145 = vmatprep.subr.mxu0 0.0
  %146 = vmatpush1.msra.mxu0 0.0
  %147 = vmatprep.subr.mxu0 0.0
  %148 = vmatpush1.msra.mxu0 0.0
  %149 = vmatprep.subr.mxu0 0.0
  %150 = vmatpush1.msra.mxu0 0.0
  %151 = vmatprep.subr.mxu0 0.0
  %152 = vmatpush1.msra.mxu0 0.0
  %153 = vmatprep.subr.mxu0 0.0
  %154 = vmatpush1.msra.mxu0 0.0
  %155 = vmatprep.subr.mxu0 0.0
  %156 = vmatpush1.msra.mxu0 0.0
  %157 = vmatprep.mubr.f32.mxu0 0.0
  %158 = vmatmul.mubr.f32.gmra.mrb[0].mxu0 %v46
  %v159 = vpop.f32.mrb[0].mxu0
  %v160 = vadd.f32 %v42, %v159
  %v161 = vpop.f32.mrb[0].mxu0
  %162 = vmatprep.mubr.f32.mxu0 0.0
  %163 = vmatmul.mubr.f32.gmra.mrb[0].mxu0 %v49
  %v164 = vpop.f32.mrb[0].mxu0
  %v165 = vadd.f32 %v42, %v164
  %v166 = vpop.f32.mrb[0].mxu0
  %167 = vmatprep.mubr.f32.mxu0 0.0
  %168 = vmatmul.mubr.f32.gmra.mrb[0].mxu0 %v52
  %v169 = vpop.f32.mrb[0].mxu0
  %v170 = vadd.f32 %v42, %v169
  %v171 = vpop.f32.mrb[0].mxu0
  %172 = vmatprep.mubr.f32.mxu0 0.0
  %173 = vmatmul.mubr.f32.gmra.mrb[0].mxu0 %v55
  %v174 = vpop.f32.mrb[0].mxu0
  %v175 = vadd.f32 %v42, %v174
  %v176 = vpop.f32.mrb[0].mxu0
  %177 = vmatprep.mubr.f32.mxu0 0.0
  %178 = vmatmul.mubr.f32.gmra.mrb[0].mxu0 %v58
  %v179 = vpop.f32.mrb[0].mxu0
  %v180 = vadd.f32 %v42, %v179
  %v181 = vpop.f32.mrb[0].mxu0
  %182 = vmatprep.mubr.f32.mxu0 0.0
  %183 = vmatmul.mubr.f32.gmra.mrb[0].mxu0 %v61
  %v184 = vpop.f32.mrb[0].mxu0
  %v185 = vadd.f32 %v42, %v184
  %v186 = vpop.f32.mrb[0].mxu0
  %187 = vmatprep.mubr.f32.mxu0 0.0
  %188 = vmatmul.mubr.f32.gmra.mrb[0].mxu0 %v64
  %v189 = vpop.f32.mrb[0].mxu0
  %v190 = vadd.f32 %v42, %v189
  %v191 = vpop.f32.mrb[0].mxu0
  %192 = vmatprep.mubr.f32.mxu0 0.0
  %193 = vmatmul.mubr.f32.gmra.mrb[0].mxu0 %v67
  %v194 = vpop.f32.mrb[0].mxu0
  %v195 = vadd.f32 %v42, %v194
  %v196 = vpop.f32.mrb[0].mxu0
  %197 = vmatprep.mubr.f32.mxu0 0.0
  %198 = vmatmul.mubr.f32.gmra.mrb[0].mxu0 %v70
  %v199 = vpop.f32.mrb[0].mxu0
  %v200 = vadd.f32 %v42, %v199
  %v201 = vpop.f32.mrb[0].mxu0
  %202 = vmatprep.mubr.f32.mxu0 0.0
  %203 = vmatmul.mubr.f32.gmra.mrb[0].mxu0 %v73
  %v204 = vpop.f32.mrb[0].mxu0
  %v205 = vadd.f32 %v42, %v204
  %v206 = vpop.f32.mrb[0].mxu0
  %207 = vmatprep.mubr.f32.mxu0 0.0
  %208 = vmatmul.mubr.f32.gmra.mrb[0].mxu0 %v76
  %v209 = vpop.f32.mrb[0].mxu0
  %v210 = vadd.f32 %v42, %v209
  %v211 = vpop.f32.mrb[0].mxu0
  %212 = vmatprep.mubr.f32.mxu0 0.0
  %213 = vmatmul.mubr.f32.gmra.mrb[0].mxu0 %v79
  %v214 = vpop.f32.mrb[0].mxu0
  %v215 = vadd.f32 %v42, %v214
  %v216 = vpop.f32.mrb[0].mxu0
  %217 = vmatprep.mubr.f32.mxu0 0.0
  %218 = vmatmul.mubr.f32.gmra.mrb[0].mxu0 %v82
  %v219 = vpop.f32.mrb[0].mxu0
  %v220 = vadd.f32 %v42, %v219
  %v221 = vpop.f32.mrb[0].mxu0
  %222 = vmatprep.mubr.f32.mxu0 0.0
  %223 = vmatmul.mubr.f32.gmra.mrb[0].mxu0 %v85
  %v224 = vpop.f32.mrb[0].mxu0
  %v225 = vadd.f32 %v42, %v224
  %v226 = vpop.f32.mrb[0].mxu0
  %227 = vmatprep.mubr.f32.mxu0 0.0
  %228 = vmatmul.mubr.f32.gmra.mrb[0].mxu0 %v88
  %v229 = vpop.f32.mrb[0].mxu0
  %v230 = vadd.f32 %v42, %v229
  %v231 = vpop.f32.mrb[0].mxu0
  %232 = vmatprep.mubr.f32.mxu0 0.0
  %233 = vmatmul.mubr.f32.gmra.mrb[0].mxu0 %v91
  %v234 = vpop.f32.mrb[0].mxu0
  %v235 = vadd.f32 %v42, %v234
  %v236 = vpop.f32.mrb[0].mxu0
  %237 = vdwg.mxu0
  %238 = vmax.xlane.f32.xlu0 %v160
  %v239 = vpop.xlane.xlu0 %238
  %240 = vmax.xlane.f32.xlu0 %v165
  %v241 = vpop.xlane.xlu0 %240
  %242 = vmax.xlane.f32.xlu0 %v170
  %v243 = vpop.xlane.xlu0 %242
  %244 = vmax.xlane.f32.xlu0 %v175
  %v245 = vpop.xlane.xlu0 %244
  %246 = vmax.xlane.f32.xlu0 %v180
  %v247 = vpop.xlane.xlu0 %246
  %248 = vmax.xlane.f32.xlu0 %v185
  %v249 = vpop.xlane.xlu0 %248
  %250 = vmax.xlane.f32.xlu0 %v190
  %v251 = vpop.xlane.xlu0 %250
  %252 = vmax.xlane.f32.xlu0 %v195
  %v253 = vpop.xlane.xlu0 %252
  %254 = vmax.xlane.f32.xlu0 %v200
  %v255 = vpop.xlane.xlu0 %254
  %256 = vmax.xlane.f32.xlu0 %v205
  %v257 = vpop.xlane.xlu0 %256
  %258 = vmax.xlane.f32.xlu0 %v210
  %v259 = vpop.xlane.xlu0 %258
  %260 = vmax.xlane.f32.xlu0 %v215
  %v261 = vpop.xlane.xlu0 %260
  %262 = vmax.xlane.f32.xlu0 %v220
  %v263 = vpop.xlane.xlu0 %262
  %264 = vmax.xlane.f32.xlu0 %v225
  %v265 = vpop.xlane.xlu0 %264
  %266 = vmax.xlane.f32.xlu0 %v230
  %v267 = vpop.xlane.xlu0 %266
  %268 = vmax.xlane.f32.xlu0 %v235
  %v269 = vpop.xlane.xlu0 %268
  %v270 = vsub.f32 %v160, %v239
  %v271 = vsub.f32 %v165, %v241
  %v272 = vsub.f32 %v170, %v243
  %v273 = vsub.f32 %v175, %v245
  %v274 = vsub.f32 %v180, %v247
  %v275 = vsub.f32 %v185, %v249
  %v276 = vsub.f32 %v190, %v251
  %v277 = vsub.f32 %v195, %v253
  %v278 = vsub.f32 %v200, %v255
  %v279 = vsub.f32 %v205, %v257
  %v280 = vsub.f32 %v210, %v259
  %v281 = vsub.f32 %v215, %v261
  %v282 = vsub.f32 %v220, %v263
  %v283 = vsub.f32 %v225, %v265
  %v284 = vsub.f32 %v230, %v267
  %v285 = vsub.f32 %v235, %v269
  %v286 = vmul.f32 %v270, 1.442695
  %v287 = vpow.pop %v286
  %v288 = vmul.f32 %v271, 1.442695
  %v289 = vpow.pop %v288
  %v290 = vmul.f32 %v272, 1.442695
  %v291 = vpow.pop %v290
  %v292 = vmul.f32 %v273, 1.442695
  %v293 = vpow.pop %v292
  %v294 = vmul.f32 %v274, 1.442695
  %v295 = vpow.pop %v294
  %v296 = vmul.f32 %v275, 1.442695
  %v297 = vpow.pop %v296
  %v298 = vmul.f32 %v276, 1.442695
  %v299 = vpow.pop %v298
  %v300 = vmul.f32 %v277, 1.442695
  %v301 = vpow.pop %v300
  %v302 = vmul.f32 %v278, 1.442695
  %v303 = vpow.pop %v302
  %v304 = vmul.f32 %v279, 1.442695
  %v305 = vpow.pop %v304
  %v306 = vmul.f32 %v280, 1.442695
  %v307 = vpow.pop %v306
  %v308 = vmul.f32 %v281, 1.442695
  %v309 = vpow.pop %v308
  %v310 = vmul.f32 %v282, 1.442695
  %v311 = vpow.pop %v310
  %v312 = vmul.f32 %v283, 1.442695
  %v313 = vpow.pop %v312
  %v314 = vmul.f32 %v284, 1.442695
  %v315 = vpow.pop %v314
  %v316 = vmul.f32 %v285, 1.442695
  %v317 = vpow.pop %v316
  %v318 = vld [vmem:[%s3] sm:$0xff]
  %v319 = vld [vmem:[%s3 + $0x8] sm:$0xff]
  %v320 = vld [vmem:[%s3 + $0x10] sm:$0xff]
  %v321 = vld [vmem:[%s3 + $0x18] sm:$0xff]
  %v322 = vld [vmem:[%s3 + $0x20] sm:$0xff]
  %v323 = vld [vmem:[%s3 + $0x28] sm:$0xff]
  %v324 = vld [vmem:[%s3 + $0x30] sm:$0xff]
  %v325 = vld [vmem:[%s3 + $0x38] sm:$0xff]
  %v326 = vld [vmem:[%s3 + $0x40] sm:$0xff]
  %v327 = vld [vmem:[%s3 + $0x48] sm:$0xff]
  %v328 = vld [vmem:[%s3 + $0x50] sm:$0xff]
  %v329 = vld [vmem:[%s3 + $0x58] sm:$0xff]
  %v330 = vld [vmem:[%s3 + $0x60] sm:$0xff]
  %v331 = vld [vmem:[%s3 + $0x68] sm:$0xff]
  %v332 = vld [vmem:[%s3 + $0x70] sm:$0xff]
  %v333 = vld [vmem:[%s3 + $0x78] sm:$0xff]
  %334 = vmatprep.subr.mxu0 0.0
  %335 = vmatpush1.msra.mxu0 %v318
  %336 = vmatprep.subr.mxu0 0.0
  %337 = vmatpush1.msra.mxu0 %v319
  %338 = vmatprep.subr.mxu0 0.0
  %339 = vmatpush1.msra.mxu0 %v320
  %340 = vmatprep.subr.mxu0 0.0
  %341 = vmatpush1.msra.mxu0 %v321
  %342 = vmatprep.subr.mxu0 0.0
  %343 = vmatpush1.msra.mxu0 %v322
  %344 = vmatprep.subr.mxu0 0.0
  %345 = vmatpush1.msra.mxu0 %v323
  %346 = vmatprep.subr.mxu0 0.0
  %347 = vmatpush1.msra.mxu0 %v324
  %348 = vmatprep.subr.mxu0 0.0
  %349 = vmatpush1.msra.mxu0 %v325
  %350 = vmatprep.subr.mxu0 0.0
  %351 = vmatpush1.msra.mxu0 %v326
  %352 = vmatprep.subr.mxu0 0.0
  %353 = vmatpush1.msra.mxu0 %v327
  %354 = vmatprep.subr.mxu0 0.0
  %355 = vmatpush1.msra.mxu0 %v328
  %356 = vmatprep.subr.mxu0 0.0
  %357 = vmatpush1.msra.mxu0 %v329
  %358 = vmatprep.subr.mxu0 0.0
  %359 = vmatpush1.msra.mxu0 %v330
  %360 = vmatprep.subr.mxu0 0.0
  %361 = vmatpush1.msra.mxu0 %v331
  %362 = vmatprep.subr.mxu0 0.0
  %363 = vmatpush1.msra.mxu0 %v332
  %364 = vmatprep.subr.mxu0 0.0
  %365 = vmatpush1.msra.mxu0 %v333
  %366 = vmatprep.subr.mxu0 0.0
  %367 = vmatpush1.msra.mxu0 0.0
  %368 = vmatprep.subr.mxu0 0.0
  %369 = vmatpush1.msra.mxu0 0.0
  %370 = vmatprep.subr.mxu0 0.0
  %371 = vmatpush1.msra.mxu0 0.0
  %372 = vmatprep.subr.mxu0 0.0
  %373 = vmatpush1.msra.mxu0 0.0
  %374 = vmatprep.subr.mxu0 0.0
  %375 = vmatpush1.msra.mxu0 0.0
  %376 = vmatprep.subr.mxu0 0.0
  %377 = vmatpush1.msra.mxu0 0.0
  %378 = vmatprep.subr.mxu0 0.0
  %379 = vmatpush1.msra.mxu0 0.0
  %380 = vmatprep.subr.mxu0 0.0
  %381 = vmatpush1.msra.mxu0 0.0
  %382 = vmatprep.subr.mxu0 0.0
  %383 = vmatpush1.msra.mxu0 0.0
  %384 = vmatprep.subr.mxu0 0.0
  %385 = vmatpush1.msra.mxu0 0.0
  %386 = vmatprep.subr.mxu0 0.0
  %387 = vmatpush1.msra.mxu0 0.0
  %388 = vmatprep.subr.mxu0 0.0
  %389 = vmatpush1.msra.mxu0 0.0
  %390 = vmatprep.subr.mxu0 0.0
  %391 = vmatpush1.msra.mxu0 0.0
  %392 = vmatprep.subr.mxu0 0.0
  %393 = vmatpush1.msra.mxu0 0.0
  %394 = vmatprep.subr.mxu0 0.0
  %395 = vmatpush1.msra.mxu0 0.0
  %396 = vmatprep.subr.mxu0 0.0
  %397 = vmatpush1.msra.mxu0 0.0
  %398 = vmatprep.mubr.f32.mxu0 0.0
  %399 = vmatmul.mubr.f32.gmra.mrb[0].mxu0 %v287
  %v400 = vpop.f32.mrb[0].mxu0
  %v401 = vadd.f32 0.0, %v400
  %v402 = vpop.f32.mrb[0].mxu0
  %403 = vmatprep.mubr.f32.mxu0 0.0
  %404 = vmatmul.mubr.f32.gmra.mrb[0].mxu0 %v289
  %v405 = vpop.f32.mrb[0].mxu0
  %v406 = vadd.f32 0.0, %v405
  %v407 = vpop.f32.mrb[0].mxu0
  %408 = vmatprep.mubr.f32.mxu0 0.0
  %409 = vmatmul.mubr.f32.gmra.mrb[0].mxu0 %v291
  %v410 = vpop.f32.mrb[0].mxu0
  %v411 = vadd.f32 0.0, %v410
  %v412 = vpop.f32.mrb[0].mxu0
  %413 = vmatprep.mubr.f32.mxu0 0.0
  %414 = vmatmul.mubr.f32.gmra.mrb[0].mxu0 %v293
  %v415 = vpop.f32.mrb[0].mxu0
  %v416 = vadd.f32 0.0, %v415
  %v417 = vpop.f32.mrb[0].mxu0
  %418 = vmatprep.mubr.f32.mxu0 0.0
  %419 = vmatmul.mubr.f32.gmra.mrb[0].mxu0 %v295
  %v420 = vpop.f32.mrb[0].mxu0
  %v421 = vadd.f32 0.0, %v420
  %v422 = vpop.f32.mrb[0].mxu0
  %423 = vmatprep.mubr.f32.mxu0 0.0
  %424 = vmatmul.mubr.f32.gmra.mrb[0].mxu0 %v297
  %v425 = vpop.f32.mrb[0].mxu0
  %v426 = vadd.f32 0.0, %v425
  %v427 = vpop.f32.mrb[0].mxu0
  %428 = vmatprep.mubr.f32.mxu0 0.0
  %429 = vmatmul.mubr.f32.gmra.mrb[0].mxu0 %v299
  %v430 = vpop.f32.mrb[0].mxu0
  %v431 = vadd.f32 0.0, %v430
  %v432 = vpop.f32.mrb[0].mxu0
  %433 = vmatprep.mubr.f32.mxu0 0.0
  %434 = vmatmul.mubr.f32.gmra.mrb[0].mxu0 %v301
  %v435 = vpop.f32.mrb[0].mxu0
  %v436 = vadd.f32 0.0, %v435
  %v437 = vpop.f32.mrb[0].mxu0
  %438 = vmatprep.mubr.f32.mxu0 0.0
  %439 = vmatmul.mubr.f32.gmra.mrb[0].mxu0 %v303
  %v440 = vpop.f32.mrb[0].mxu0
  %v441 = vadd.f32 0.0, %v440
  %v442 = vpop.f32.mrb[0].mxu0
  %443 = vmatprep.mubr.f32.mxu0 0.0
  %444 = vmatmul.mubr.f32.gmra.mrb[0].mxu0 %v305
  %v445 = vpop.f32.mrb[0].mxu0
  %v446 = vadd.f32 0.0, %v445
  %v447 = vpop.f32.mrb[0].mxu0
  %448 = vmatprep.mubr.f32.mxu0 0.0
  %449 = vmatmul.mubr.f32.gmra.mrb[0].mxu0 %v307
  %v450 = vpop.f32.mrb[0].mxu0
  %v451 = vadd.f32 0.0, %v450
  %v452 = vpop.f32.mrb[0].mxu0
  %453 = vmatprep.mubr.f32.mxu0 0.0
  %454 = vmatmul.mubr.f32.gmra.mrb[0].mxu0 %v309
  %v455 = vpop.f32.mrb[0].mxu0
  %v456 = vadd.f32 0.0, %v455
  %v457 = vpop.f32.mrb[0].mxu0
  %458 = vmatprep.mubr.f32.mxu0 0.0
  %459 = vmatmul.mubr.f32.gmra.mrb[0].mxu0 %v311
  %v460 = vpop.f32.mrb[0].mxu0
  %v461 = vadd.f32 0.0, %v460
  %v462 = vpop.f32.mrb[0].mxu0
  %463 = vmatprep.mubr.f32.mxu0 0.0
  %464 = vmatmul.mubr.f32.gmra.mrb[0].mxu0 %v313
  %v465 = vpop.f32.mrb[0].mxu0
  %v466 = vadd.f32 0.0, %v465
  %v467 = vpop.f32.mrb[0].mxu0
  %468 = vmatprep.mubr.f32.mxu0 0.0
  %469 = vmatmul.mubr.f32.gmra.mrb[0].mxu0 %v315
  %v470 = vpop.f32.mrb[0].mxu0
  %v471 = vadd.f32 0.0, %v470
  %v472 = vpop.f32.mrb[0].mxu0
  %473 = vmatprep.mubr.f32.mxu0 0.0
  %474 = vmatmul.mubr.f32.gmra.mrb[0].mxu0 %v317
  %v475 = vpop.f32.mrb[0].mxu0
  %v476 = vadd.f32 0.0, %v475
  %v477 = vpop.f32.mrb[0].mxu0
  %478 = vdwg.mxu0
  %495 = vrot.lane.b32.xlu0 %v401, 127
  %v496 = vpop.permute.xlu0 %495
  %497 = vrot.lane.b32.xlu0 %v406, 127
  %v498 = vpop.permute.xlu0 %497
  %499 = vrot.lane.b32.xlu0 %v411, 127
  %v500 = vpop.permute.xlu0 %499
  %501 = vrot.lane.b32.xlu0 %v416, 127
  %v502 = vpop.permute.xlu0 %501
  %503 = vrot.lane.b32.xlu0 %v421, 127
  %v504 = vpop.permute.xlu0 %503
  %505 = vrot.lane.b32.xlu0 %v426, 127
  %v506 = vpop.permute.xlu0 %505
  %507 = vrot.lane.b32.xlu0 %v431, 127
  %v508 = vpop.permute.xlu0 %507
  %509 = vrot.lane.b32.xlu0 %v436, 127
  %v510 = vpop.permute.xlu0 %509
  %511 = vrot.lane.b32.xlu0 %v441, 127
  %v512 = vpop.permute.xlu0 %511
  %513 = vrot.lane.b32.xlu0 %v446, 127
  %v514 = vpop.permute.xlu0 %513
  %515 = vrot.lane.b32.xlu0 %v451, 127
  %v516 = vpop.permute.xlu0 %515
  %517 = vrot.lane.b32.xlu0 %v456, 127
  %v518 = vpop.permute.xlu0 %517
  %519 = vrot.lane.b32.xlu0 %v461, 127
  %v520 = vpop.permute.xlu0 %519
  %521 = vrot.lane.b32.xlu0 %v466, 127
  %v522 = vpop.permute.xlu0 %521
  %523 = vrot.lane.b32.xlu0 %v471, 127
  %v524 = vpop.permute.xlu0 %523
  %525 = vrot.lane.b32.xlu0 %v476, 127
  %v526 = vpop.permute.xlu0 %525
  %v543 = vrcp.pop %v496
  %v544 = vmul.f32 %v401, %v543
  %v545 = vrcp.pop %v498
  %v546 = vmul.f32 %v406, %v545
  %v547 = vrcp.pop %v500
  %v548 = vmul.f32 %v411, %v547
  %v549 = vrcp.pop %v502
  %v550 = vmul.f32 %v416, %v549
  %v551 = vrcp.pop %v504
  %v552 = vmul.f32 %v421, %v551
  %v553 = vrcp.pop %v506
  %v554 = vmul.f32 %v426, %v553
  %v555 = vrcp.pop %v508
  %v556 = vmul.f32 %v431, %v555
  %v557 = vrcp.pop %v510
  %v558 = vmul.f32 %v436, %v557
  %v559 = vrcp.pop %v512
  %v560 = vmul.f32 %v441, %v559
  %v561 = vrcp.pop %v514
  %v562 = vmul.f32 %v446, %v561
  %v563 = vrcp.pop %v516
  %v564 = vmul.f32 %v451, %v563
  %v565 = vrcp.pop %v518
  %v566 = vmul.f32 %v456, %v565
  %v567 = vrcp.pop %v520
  %v568 = vmul.f32 %v461, %v567
  %v569 = vrcp.pop %v522
  %v570 = vmul.f32 %v466, %v569
  %v571 = vrcp.pop %v524
  %v572 = vmul.f32 %v471, %v571
  %v573 = vrcp.pop %v526
  %v574 = vmul.f32 %v476, %v573
  %vm575 = vcmask 7168
  %576 = vst.msk [vmem:[%s4] sm:$0xff] %vm575, %v544
  %577 = vst.msk [vmem:[%s4 + $0x8] sm:$0xff] %vm575, %v546
  %578 = vst.msk [vmem:[%s4 + $0x10] sm:$0xff] %vm575, %v548
  %579 = vst.msk [vmem:[%s4 + $0x18] sm:$0xff] %vm575, %v550
  %580 = vst.msk [vmem:[%s4 + $0x20] sm:$0xff] %vm575, %v552
  %581 = vst.msk [vmem:[%s4 + $0x28] sm:$0xff] %vm575, %v554
  %582 = vst.msk [vmem:[%s4 + $0x30] sm:$0xff] %vm575, %v556
  %583 = vst.msk [vmem:[%s4 + $0x38] sm:$0xff] %vm575, %v558
  %584 = vst.msk [vmem:[%s4 + $0x40] sm:$0xff] %vm575, %v560
  %585 = vst.msk [vmem:[%s4 + $0x48] sm:$0xff] %vm575, %v562
  %586 = vst.msk [vmem:[%s4 + $0x50] sm:$0xff] %vm575, %v564
  %587 = vst.msk [vmem:[%s4 + $0x58] sm:$0xff] %vm575, %v566
  %588 = vst.msk [vmem:[%s4 + $0x60] sm:$0xff] %vm575, %v568
  %589 = vst.msk [vmem:[%s4 + $0x68] sm:$0xff] %vm575, %v570
  %590 = vst.msk [vmem:[%s4 + $0x70] sm:$0xff] %vm575, %v572
  %591 = vst.msk [vmem:[%s4 + $0x78] sm:$0xff] %vm575, %v574
  // Predicated region
  $region18: #{tpu_custom_call.1} parent=0 // pred_check
    _
  $region19: #{tpu_custom_call.1} parent=0 // pred_check_branch
    %593 = sbr.rel (0) target = $region21
  $region20: #{tpu_custom_call.1} parent=0 // pred_region
    _
  $region21: #{tpu_custom_call.1} parent=0 // pred_fallthru
    _
  // Predicated region
  $region22: #{tpu_custom_call.1} parent=0 // pred_check
    _
  $region23: #{tpu_custom_call.1} parent=0 // pred_check_branch
    %595 = sbr.rel (0) target = $region25
  $region24: #{tpu_custom_call.1} parent=0 // pred_region
    _
  $region25: #{tpu_custom_call.1} parent=0 // pred_fallthru
    _

</llo_original>
